<compile_context>
chip_gen: v7x
topology: tpu7x:2x2x1
jax: 0.10.0
libtpu: 0.0.40
codegen_flags: <defaults>
</compile_context>

<pallas_src>
import itertools
import math

import numpy as np
import jax
import jax.numpy as jnp
from jax import lax
from jax.experimental import pallas as pl
from jax.experimental.pallas import tpu as pltpu

_LANES = 128
_DEFAULT_MAX_TILE_ROWS = 1024   # 1024 * 128 * 4 B = 512 KiB per f32 input block


def _view_bounds(Ms):
    ends = list(itertools.accumulate(Ms))
    begins = [0] + ends[:-1]
    return begins, ends


# ----------------------------------------------------------------------------
# Pallas kernel: elementwise NLL + in-kernel intra mask + fold into small
# resident per-core accumulators.  Per-channel fold happens once, in JAX.
# ----------------------------------------------------------------------------
def _make_kernel(criterion, predict_uncertainty, nll_a, nll_c,
                 tile_rows, acc_rows, n_valid_rows, M, Ms, steps_per_core):
    begins, ends = _view_bounds(Ms)
    K = tile_rows // acc_rows
    n_valid_elems = n_valid_rows * _LANES

    def _divmod_const(x, d):
        # Exact floor div/mod of a non-negative int32 vector by a positive
        # Python-constant divisor, using only f32 mul/floor + one int fixup.
        # Exact for x < 2**23 (asserted in the wrapper); avoids relying on
        # vector integer division support in Mosaic.
        if d == 1:
            return x, jnp.zeros_like(x)
        q = jnp.floor(x.astype(jnp.float32) * np.float32(1.0 / d)).astype(jnp.int32)
        r = x - q * d
        q = q + (r >= d).astype(jnp.int32) - (r < 0).astype(jnp.int32)
        r = x - q * d
        return q, r

    def accumulate(mu, lv, gt, tot_ref, intra_ref):
        @pl.when(pl.program_id(1) == 0)
        def _():
            tot_ref[...] = jnp.zeros_like(tot_ref)
            intra_ref[...] = jnp.zeros_like(intra_ref)

        mu = mu.astype(jnp.float32)
        gt = gt.astype(jnp.float32)
        diff = mu - gt
        nll = diff * diff if criterion == "mse" else jnp.abs(diff)
        if predict_uncertainty:
            lv = lv.astype(jnp.float32)
            nll = nll_a * (nll * jnp.exp(-lv) + lv + nll_c)

        # Global flat element index of every lane of this tile.
        g = pl.program_id(0) * steps_per_core + pl.program_id(1)
        base = g * (tile_rows * _LANES)
        row_i = lax.broadcasted_iota(jnp.int32, (tile_rows, _LANES), 0)
        lane_i = lax.broadcasted_iota(jnp.int32, (tile_rows, _LANES), 1)
        e_idx = base + row_i * _LANES + lane_i

        # Valid = inside the logical array (masks the partial last block and
        # any clamped/duplicated per-core step).
        valid = e_idx < n_valid_elems

        # Recover (row, col) of the M x M pose matrix (channel = lane % 4 is
        # handled by the JAX-side fold).  e_idx = ((b*M + r)*M + c)*4 + ch.
        p = e_idx >> 2
        q, col = _divmod_const(p, M)
        _, rowm = _divmod_const(q, M)

        intra = None
        for s, e in zip(begins, ends):          # len(Ms) is tiny -> unrolled
            blk = (rowm >= s) & (rowm < e) & (col >= s) & (col < e)
            intra = blk if intra is None else (intra | blk)

        tot_c = jnp.where(valid, nll, 0.0)
        intra_c = jnp.where(valid & intra, nll, 0.0)

        # Fold (tile_rows, 128) -> (1, acc_rows, 128) with strided VALU adds
        # (row groups of `acc_rows` respect the (8,128) tiling -> free reshape).
        tot_ref[...] += jnp.sum(tot_c.reshape(K, acc_rows, _LANES),
                                axis=0, keepdims=True)
        intra_ref[...] += jnp.sum(intra_c.reshape(K, acc_rows, _LANES),
                                  axis=0, keepdims=True)

    if predict_uncertainty:
        def kernel(mu_ref, lv_ref, gt_ref, tot_ref, intra_ref):
            accumulate(mu_ref[...], lv_ref[...], gt_ref[...], tot_ref, intra_ref)
    else:
        def kernel(mu_ref, gt_ref, tot_ref, intra_ref):
            accumulate(mu_ref[...], None, gt_ref[...], tot_ref, intra_ref)
    return kernel


# ----------------------------------------------------------------------------
# Pallas reduction driver: [R,128] slabs -> per-channel (4,) total & intra sums
# ----------------------------------------------------------------------------
def _reduce_sums(mu2d, lv2d, gt2d, M, Ms, criterion, predict_uncertainty,
                 nll_a, nll_c, max_tile_rows):
    R = mu2d.shape[0]
    if R <= max_tile_rows:
        tile_rows = R
    else:
        tile_rows = max(16, (max_tile_rows // 16) * 16)   # bf16-safe alignment

    n_blocks = pl.cdiv(R, tile_rows)
    # Leading "parallel" axis: both TensorCores on v7x, harmless on v5e/v6e.
    num_core_slots = 2 if n_blocks >= 2 else 1
    steps_per_core = pl.cdiv(n_blocks, num_core_slots)
    acc_rows = 8 if tile_rows % 8 == 0 else tile_rows

    kernel = _make_kernel(criterion, predict_uncertainty, nll_a, nll_c,
                          tile_rows, acc_rows, R, M, Ms, steps_per_core)

    def in_map(c, i):
        g = c * steps_per_core + i
        return (jnp.minimum(g, n_blocks - 1), 0)   # clamp; masked in-kernel

    inputs = [mu2d]
    if predict_uncertainty:
        inputs.append(lv2d)
    inputs.append(gt2d)
    in_specs = [pl.BlockSpec((tile_rows, _LANES), in_map) for _ in inputs]

    acc_spec = pl.BlockSpec((1, acc_rows, _LANES), lambda c, i: (c, 0, 0))
    out_shape = (jax.ShapeDtypeStruct((num_core_slots, acc_rows, _LANES), jnp.float32),
                 jax.ShapeDtypeStruct((num_core_slots, acc_rows, _LANES), jnp.float32))

    in_block_bytes = sum(tile_rows * _LANES * x.dtype.itemsize for x in inputs)
    vmem_limit = int(min(2 * in_block_bytes + (32 << 20), 56 << 20))

    n_elems = R * _LANES
    flops = (10 if predict_uncertainty else 4) * n_elems
    transcendentals = n_elems if predict_uncertainty else 0
    bytes_accessed = sum(int(x.size) * x.dtype.itemsize for x in inputs) \
        + 2 * num_core_slots * acc_rows * _LANES * 4

    tot, intra = pl.pallas_call(
        kernel,
        out_shape=out_shape,
        grid_spec=pltpu.PrefetchScalarGridSpec(
            num_scalar_prefetch=0,
            grid=(num_core_slots, steps_per_core),
            in_specs=in_specs,
            out_specs=[acc_spec, acc_spec],
        ),
        compiler_params=pltpu.CompilerParams(
            dimension_semantics=("parallel", "arbitrary"),
            vmem_limit_bytes=vmem_limit,
        ),
        cost_estimate=pl.CostEstimate(flops=flops,
                                      transcendentals=transcendentals,
                                      bytes_accessed=bytes_accessed),
    )(*inputs)

    # Tiny one-time fold: channel = lane % 4 (lane is the fastest flat axis).
    total_c = tot.reshape(-1, 4).sum(axis=0)
    intra_c = intra.reshape(-1, 4).sum(axis=0)
    return total_c, intra_c


# ----------------------------------------------------------------------------
# Plain-JAX helpers (elementwise NLL, <128-element unaligned tail)
# ----------------------------------------------------------------------------
def _nll_elementwise(mu, lv, gt, criterion, predict_uncertainty, nll_a, nll_c):
    mu = mu.astype(jnp.float32)
    gt = gt.astype(jnp.float32)
    diff = mu - gt
    nll = diff * diff if criterion == "mse" else jnp.abs(diff)
    if predict_uncertainty:
        lv = lv.astype(jnp.float32)
        nll = nll_a * (nll * jnp.exp(-lv) + lv + nll_c)
    return nll


def _tail_sums(mu_t, lv_t, gt_t, start, M, Ms, criterion, predict_uncertainty,
               nll_a, nll_c):
    n = mu_t.shape[0]
    nll = _nll_elementwise(mu_t, lv_t, gt_t, criterion, predict_uncertainty,
                           nll_a, nll_c)
    idx = start + jnp.arange(n, dtype=jnp.int32)
    ch = idx % 4
    p = idx // 4
    col = p % M
    rowm = (p // M) % M
    begins, ends = _view_bounds(Ms)
    intra = jnp.zeros((n,), dtype=bool)
    for s, e in zip(begins, ends):
        intra = intra | ((rowm >= s) & (rowm < e) & (col >= s) & (col < e))
    onehot = (ch[:, None] == jnp.arange(4, dtype=jnp.int32)[None, :]).astype(jnp.float32)
    total_c = jnp.sum(nll[:, None] * onehot, axis=0)
    intra_c = jnp.sum((nll * intra.astype(jnp.float32))[:, None] * onehot, axis=0)
    return total_c, intra_c


# ----------------------------------------------------------------------------
# Python wrapper reproducing PoseLoss.forward semantics
# ----------------------------------------------------------------------------
def pose_loss(pred, gt_dT, Ms,
              criterion: str = "mse",
              alpha_t: float = 0.5,
              alpha_s: float = 0.75,
              alpha_ts: float = 0.5,
              predict_uncertainty: bool = False,
              max_tile_rows: int = _DEFAULT_MAX_TILE_ROWS):
    assert criterion in ("mse", "l1"), f"Unsupported criterion: {criterion}"
    nll_a = 0.5 if criterion == "mse" else 1.0
    nll_c = math.log(2 * math.pi) if criterion == "mse" else math.log(2)

    mu, logvar = pred
    mu = jnp.asarray(mu)
    gt_dT = jnp.asarray(gt_dT)
    B, M, M2, C = gt_dT.shape
    assert M == M2 and C == 4
    assert sum(Ms) == M
    # In-kernel index recovery uses an f32-based constant divmod that is exact
    # for pair indices < 2**23.  TODO(synk): integer magic-multiply for larger.
    assert B * M * M < (1 << 23), "pose matrix too large for in-kernel index math"

    E = B * M * M * 4                 # total pose elements
    R = E // _LANES                   # full lane-dense rows
    tail_len = E - R * _LANES

    mu_f = mu.reshape(-1)
    gt_f = gt_dT.reshape(-1)
    lv_f = jnp.asarray(logvar).reshape(-1) if predict_uncertainty else None

    total_c = jnp.zeros((4,), jnp.float32)
    intra_c = jnp.zeros((4,), jnp.float32)

    if R > 0:
        mu2d = mu_f[:R * _LANES].reshape(R, _LANES)
        gt2d = gt_f[:R * _LANES].reshape(R, _LANES)
        lv2d = lv_f[:R * _LANES].reshape(R, _LANES) if predict_uncertainty else None
        tot_k, intra_k = _reduce_sums(mu2d, lv2d, gt2d, M, Ms, criterion,
                                      predict_uncertainty, nll_a, nll_c,
                                      max_tile_rows)
        total_c = total_c + tot_k
        intra_c = intra_c + intra_k

    if tail_len > 0:
        tot_t, intra_t = _tail_sums(
            mu_f[R * _LANES:],
            lv_f[R * _LANES:] if predict_uncertainty else None,
            gt_f[R * _LANES:], R * _LANES, M, Ms, criterion,
            predict_uncertainty, nll_a, nll_c)
        total_c = total_c + tot_t
        intra_c = intra_c + intra_t

    t_all = total_c[0] + total_c[1]
    s_all = total_c[2] + total_c[3]
    t_intra = intra_c[0] + intra_c[1]
    s_intra = intra_c[2] + intra_c[3]

    sum_Ms_sq = sum(m * m for m in Ms)
    diag_count = float(sum_Ms_sq * B)
    offdiag_count = float((M * M - sum_Ms_sq) * B)

    t_inter = t_all - t_intra
    s_inter = s_all - s_intra
    loss_intra_t = t_intra / diag_count
    loss_inter_t = t_inter / offdiag_count
    loss_intra_s = s_intra / diag_count
    loss_inter_s = s_inter / offdiag_count
    loss_t = alpha_t * loss_inter_t + (1 - alpha_t) * loss_intra_t
    loss_s = alpha_s * loss_inter_s + (1 - alpha_s) * loss_intra_s
    loss = alpha_ts * loss_t + (1 - alpha_ts) * loss_s

    return {
        "loss_pose_intra_t": loss_intra_t,
        "loss_pose_inter_t": loss_inter_t,
        "loss_pose_intra_s": loss_intra_s,
        "loss_pose_inter_s": loss_inter_s,
        "loss_pose_t": loss_t,
        "loss_pose_s": loss_s,
        "loss_pose": loss,
    }


# ----------------------------------------------------------------------------
# Pure-JAX reference (mirrors the PyTorch forward) for a correctness check
# ----------------------------------------------------------------------------
def pose_loss_ref(pred, gt_dT, Ms,
                  criterion="mse", alpha_t=0.5, alpha_s=0.75, alpha_ts=0.5,
                  predict_uncertainty=False):
    nll_a = 0.5 if criterion == "mse" else 1.0
    nll_c = math.log(2 * math.pi) if criterion == "mse" else math.log(2)
    B = gt_dT.shape[0]
    mu, logvar = pred
    crit = (lambda x: x * x) if criterion == "mse" else jnp.abs
    nll = crit(mu - gt_dT)
    if predict_uncertainty:
        nll = nll_a * (nll / jnp.exp(logvar) + logvar + nll_c)
    total = nll.sum(axis=(0, 1, 2))
    t_all = total[0:2].sum()
    s_all = total[2:4].sum()
    view_ends = list(itertools.accumulate(Ms))
    view_begins = [0] + view_ends[:-1]
    intra = sum(nll[:, s:e, s:e, :].sum(axis=(0, 1, 2))
                for s, e in zip(view_begins, view_ends))
    t_intra = intra[0:2].sum()
    s_intra = intra[2:4].sum()
    M = nll.shape[1]
    sum_Ms_sq = sum(m * m for m in Ms)
    diag_count = sum_Ms_sq * B
    offdiag_count = (M * M - sum_Ms_sq) * B
    t_inter = t_all - t_intra
    s_inter = s_all - s_intra
    loss_intra_t = t_intra / diag_count
    loss_inter_t = t_inter / offdiag_count
    loss_intra_s = s_intra / diag_count
    loss_inter_s = s_inter / offdiag_count
    loss_t = alpha_t * loss_inter_t + (1 - alpha_t) * loss_intra_t
    loss_s = alpha_s * loss_inter_s + (1 - alpha_s) * loss_intra_s
    loss = alpha_ts * loss_t + (1 - alpha_ts) * loss_s
    return {
        "loss_pose_intra_t": loss_intra_t,
        "loss_pose_inter_t": loss_inter_t,
        "loss_pose_intra_s": loss_intra_s,
        "loss_pose_inter_s": loss_inter_s,
        "loss_pose_t": loss_t,
        "loss_pose_s": loss_s,
        "loss_pose": loss,
    }


if __name__ == "__main__":
    key = jax.random.PRNGKey(0)

    def make_inputs(B, Ms, k, dtype=jnp.float32):
        M = sum(Ms)
        k1, k2, k3 = jax.random.split(k, 3)
        mu = jax.random.normal(k1, (B, M, M, 4), dtype=jnp.float32)
        logvar = 0.1 * jax.random.normal(k2, (B, M, M, 4), dtype=jnp.float32)
        gt = jax.random.normal(k3, (B, M, M, 4), dtype=jnp.float32)
        return (mu.astype(dtype), logvar.astype(dtype), gt.astype(dtype))

    cases = [
        # (B, Ms, criterion, predict_uncertainty, max_tile_rows, dtype)
        (2, [3, 5], "mse", False, _DEFAULT_MAX_TILE_ROWS, jnp.float32),  # single tile, aligned
        (2, [3, 5], "mse", True,  _DEFAULT_MAX_TILE_ROWS, jnp.float32),
        (2, [3, 5], "l1",  True,  _DEFAULT_MAX_TILE_ROWS, jnp.float32),
        (1, [3, 4], "mse", True,  _DEFAULT_MAX_TILE_ROWS, jnp.float32),  # E%128!=0 -> JAX tail
        (20, [3, 5], "mse", True, 16, jnp.float32),    # multi-step, 2 core slots, clamp + mask
        (4, [3, 5], "mse", True,  _DEFAULT_MAX_TILE_ROWS, jnp.bfloat16), # native bf16 streaming
        (1, [2, 2], "l1",  False, _DEFAULT_MAX_TILE_ROWS, jnp.float32),  # E<128 -> pure JAX path
    ]

    ok = True
    for idx, (B, Ms, criterion, pu, mtr, dt) in enumerate(cases):
        mu, logvar, gt = make_inputs(B, Ms, jax.random.fold_in(key, idx), dtype=dt)
        out = pose_loss((mu, logvar), gt, Ms, criterion=criterion,
                        predict_uncertainty=pu, max_tile_rows=mtr)
        out = {k: np.asarray(jax.block_until_ready(v)) for k, v in out.items()}
        # Reference on the exact (upcast) values the kernel saw.
        ref = pose_loss_ref((mu.astype(jnp.float32), logvar.astype(jnp.float32)),
                            gt.astype(jnp.float32), Ms, criterion=criterion,
                            predict_uncertainty=pu)
        for k in out:
            if not np.allclose(out[k], np.asarray(ref[k]), rtol=1e-4, atol=1e-5):
                ok = False
                print(f"MISMATCH case{idx} {criterion}/unc={pu}/{np.dtype(dt).name} {k}: "
                      f"{out[k]} vs {np.asarray(ref[k])}")

    if ok:
        print("KERNEL_OK")
</pallas_src>

<mosaic_0001>
module attributes {stable_mosaic.version = 11 : i64} {
  func.func @kernel(%arg0: i32, %arg1: i32, %arg2: memref<4x128xf32, #tpu.memory_space<vmem>>, %arg3: memref<4x128xf32, #tpu.memory_space<vmem>>, %arg4: memref<1x4x128xf32, #tpu.memory_space<vmem>>, %arg5: memref<1x4x128xf32, #tpu.memory_space<vmem>>) attributes {dimension_semantics = [#tpu.dimension_semantics<parallel>, #tpu.dimension_semantics<arbitrary>], iteration_bounds = array<i64: 1, 1>, scalar_prefetch = 0 : i64, scratch_operands = 0 : i64, tpu.core_type = #tpu.core_type<tc>, window_params = [{transform_indices = @transform_0, window_bounds = array<i64: 4, 128>}, {transform_indices = @transform_1, window_bounds = array<i64: 4, 128>}, {transform_indices = @transform_2, window_bounds = array<i64: 1, 4, 128>}, {transform_indices = @transform_3, window_bounds = array<i64: 1, 4, 128>}]} {
    %c0 = arith.constant 0 : index
    %c0_0 = arith.constant 0 : index
    %0 = vector.load %arg2[%c0, %c0_0] : memref<4x128xf32, #tpu.memory_space<vmem>>, vector<4x128xf32>
    %c0_1 = arith.constant 0 : index
    %c0_2 = arith.constant 0 : index
    %1 = vector.load %arg3[%c0_1, %c0_2] : memref<4x128xf32, #tpu.memory_space<vmem>>, vector<4x128xf32>
    %c0_i32 = arith.constant 0 : i32
    %2 = arith.cmpi eq, %arg1, %c0_i32 : i32
    %3 = arith.extui %2 : i1 to i32
    %c0_i32_3 = arith.constant 0 : i32
    %4 = arith.cmpi ne, %3, %c0_i32_3 : i32
    scf.if %4 {
      %cst_36 = arith.constant 0.000000e+00 : f32
      %99 = vector.broadcast %cst_36 : f32 to vector<1x4x128xf32>
      %c0_37 = arith.constant 0 : index
      %c0_38 = arith.constant 0 : index
      %c0_39 = arith.constant 0 : index
      %100 = vector.load %arg4[%c0_37, %c0_38, %c0_39] : memref<1x4x128xf32, #tpu.memory_space<vmem>>, vector<1x4x128xf32>
      tpu.vector_store %arg4[%c0_37, %c0_38, %c0_39], %99 {strides = array<i32>} : memref<1x4x128xf32, #tpu.memory_space<vmem>>, vector<1x4x128xf32>,
      %cst_40 = arith.constant 0.000000e+00 : f32
      %101 = vector.broadcast %cst_40 : f32 to vector<1x4x128xf32>
      %c0_41 = arith.constant 0 : index
      %c0_42 = arith.constant 0 : index
      %c0_43 = arith.constant 0 : index
      %102 = vector.load %arg5[%c0_41, %c0_42, %c0_43] : memref<1x4x128xf32, #tpu.memory_space<vmem>>, vector<1x4x128xf32>
      tpu.vector_store %arg5[%c0_41, %c0_42, %c0_43], %101 {strides = array<i32>} : memref<1x4x128xf32, #tpu.memory_space<vmem>>, vector<1x4x128xf32>,
    } else {
    }
    %5 = arith.subf %0, %1 : vector<4x128xf32>
    %6 = arith.mulf %5, %5 : vector<4x128xf32>
    %c1_i32 = arith.constant 1 : i32
    %7 = arith.muli %arg0, %c1_i32 : i32
    %8 = arith.addi %7, %arg1 : i32
    %c512_i32 = arith.constant 512 : i32
    %9 = arith.muli %8, %c512_i32 : i32
    %10 = tpu.iota {dimensions = array<i32: 0>} : vector<4x128xi32>
    %11 = tpu.iota {dimensions = array<i32: 1>} : vector<4x128xi32>
    %c128_i32 = arith.constant 128 : i32
    %12 = vector.broadcast %c128_i32 : i32 to vector<4x128xi32>
    %13 = arith.muli %10, %12 : vector<4x128xi32>
    %14 = vector.broadcast %9 : i32 to vector<4x128xi32>
    %15 = arith.addi %14, %13 : vector<4x128xi32>
    %16 = arith.addi %15, %11 : vector<4x128xi32>
    %c512_i32_4 = arith.constant 512 : i32
    %17 = vector.broadcast %c512_i32_4 : i32 to vector<4x128xi32>
    %18 = arith.cmpi slt, %16, %17 : vector<4x128xi32>
    %c2_i32 = arith.constant 2 : i32
    %19 = vector.broadcast %c2_i32 : i32 to vector<4x128xi32>
    %20 = arith.shrsi %16, %19 : vector<4x128xi32>
    %21 = arith.sitofp %20 : vector<4x128xi32> to vector<4x128xf32>
    %cst = arith.constant 1.250000e-01 : f32
    %22 = vector.broadcast %cst : f32 to vector<4x128xf32>
    %23 = arith.mulf %21, %22 : vector<4x128xf32>
    %24 = math.floor %23 : vector<4x128xf32>
    %25 = arith.fptosi %24 : vector<4x128xf32> to vector<4x128xi32>
    %c8_i32 = arith.constant 8 : i32
    %26 = vector.broadcast %c8_i32 : i32 to vector<4x128xi32>
    %27 = arith.muli %25, %26 : vector<4x128xi32>
    %28 = arith.subi %20, %27 : vector<4x128xi32>
    %c8_i32_5 = arith.constant 8 : i32
    %29 = vector.broadcast %c8_i32_5 : i32 to vector<4x128xi32>
    %30 = arith.cmpi sge, %28, %29 : vector<4x128xi32>
    %31 = arith.extui %30 : vector<4x128xi1> to vector<4x128xi32>
    %32 = arith.addi %25, %31 : vector<4x128xi32>
    %c0_i32_6 = arith.constant 0 : i32
    %33 = vector.broadcast %c0_i32_6 : i32 to vector<4x128xi32>
    %34 = arith.cmpi slt, %28, %33 : vector<4x128xi32>
    %35 = arith.extui %34 : vector<4x128xi1> to vector<4x128xi32>
    %36 = arith.subi %32, %35 : vector<4x128xi32>
    %c8_i32_7 = arith.constant 8 : i32
    %37 = vector.broadcast %c8_i32_7 : i32 to vector<4x128xi32>
    %38 = arith.muli %36, %37 : vector<4x128xi32>
    %39 = arith.subi %20, %38 : vector<4x128xi32>
    %40 = arith.sitofp %36 : vector<4x128xi32> to vector<4x128xf32>
    %cst_8 = arith.constant 1.250000e-01 : f32
    %41 = vector.broadcast %cst_8 : f32 to vector<4x128xf32>
    %42 = arith.mulf %40, %41 : vector<4x128xf32>
    %43 = math.floor %42 : vector<4x128xf32>
    %44 = arith.fptosi %43 : vector<4x128xf32> to vector<4x128xi32>
    %c8_i32_9 = arith.constant 8 : i32
    %45 = vector.broadcast %c8_i32_9 : i32 to vector<4x128xi32>
    %46 = arith.muli %44, %45 : vector<4x128xi32>
    %47 = arith.subi %36, %46 : vector<4x128xi32>
    %c8_i32_10 = arith.constant 8 : i32
    %48 = vector.broadcast %c8_i32_10 : i32 to vector<4x128xi32>
    %49 = arith.cmpi sge, %47, %48 : vector<4x128xi32>
    %50 = arith.extui %49 : vector<4x128xi1> to vector<4x128xi32>
    %51 = arith.addi %44, %50 : vector<4x128xi32>
    %c0_i32_11 = arith.constant 0 : i32
    %52 = vector.broadcast %c0_i32_11 : i32 to vector<4x128xi32>
    %53 = arith.cmpi slt, %47, %52 : vector<4x128xi32>
    %54 = arith.extui %53 : vector<4x128xi1> to vector<4x128xi32>
    %55 = arith.subi %51, %54 : vector<4x128xi32>
    %c8_i32_12 = arith.constant 8 : i32
    %56 = vector.broadcast %c8_i32_12 : i32 to vector<4x128xi32>
    %57 = arith.muli %55, %56 : vector<4x128xi32>
    %58 = arith.subi %36, %57 : vector<4x128xi32>
    %c0_i32_13 = arith.constant 0 : i32
    %59 = vector.broadcast %c0_i32_13 : i32 to vector<4x128xi32>
    %60 = arith.cmpi sge, %58, %59 : vector<4x128xi32>
    %c3_i32 = arith.constant 3 : i32
    %61 = vector.broadcast %c3_i32 : i32 to vector<4x128xi32>
    %62 = arith.cmpi slt, %58, %61 : vector<4x128xi32>
    %63 = arith.andi %60, %62 : vector<4x128xi1>
    %c0_i32_14 = arith.constant 0 : i32
    %64 = vector.broadcast %c0_i32_14 : i32 to vector<4x128xi32>
    %65 = arith.cmpi sge, %39, %64 : vector<4x128xi32>
    %66 = arith.andi %63, %65 : vector<4x128xi1>
    %c3_i32_15 = arith.constant 3 : i32
    %67 = vector.broadcast %c3_i32_15 : i32 to vector<4x128xi32>
    %68 = arith.cmpi slt, %39, %67 : vector<4x128xi32>
    %69 = arith.andi %66, %68 : vector<4x128xi1>
    %c3_i32_16 = arith.constant 3 : i32
    %70 = vector.broadcast %c3_i32_16 : i32 to vector<4x128xi32>
    %71 = arith.cmpi sge, %58, %70 : vector<4x128xi32>
    %c8_i32_17 = arith.constant 8 : i32
    %72 = vector.broadcast %c8_i32_17 : i32 to vector<4x128xi32>
    %73 = arith.cmpi slt, %58, %72 : vector<4x128xi32>
    %74 = arith.andi %71, %73 : vector<4x128xi1>
    %c3_i32_18 = arith.constant 3 : i32
    %75 = vector.broadcast %c3_i32_18 : i32 to vector<4x128xi32>
    %76 = arith.cmpi sge, %39, %75 : vector<4x128xi32>
    %77 = arith.andi %74, %76 : vector<4x128xi1>
    %c8_i32_19 = arith.constant 8 : i32
    %78 = vector.broadcast %c8_i32_19 : i32 to vector<4x128xi32>
    %79 = arith.cmpi slt, %39, %78 : vector<4x128xi32>
    %80 = arith.andi %77, %79 : vector<4x128xi1>
    %81 = arith.ori %69, %80 : vector<4x128xi1>
    %cst_20 = arith.constant 0.000000e+00 : f32
    %82 = vector.broadcast %cst_20 : f32 to vector<4x128xf32>
    %83 = arith.select %18, %6, %82 : vector<4x128xi1>, vector<4x128xf32>
    %84 = arith.andi %18, %81 : vector<4x128xi1>
    %cst_21 = arith.constant 0.000000e+00 : f32
    %85 = vector.broadcast %cst_21 : f32 to vector<4x128xf32>
    %86 = arith.select %84, %6, %85 : vector<4x128xi1>, vector<4x128xf32>
    %c0_22 = arith.constant 0 : index
    %c0_23 = arith.constant 0 : index
    %c0_24 = arith.constant 0 : index
    %87 = vector.load %arg4[%c0_22, %c0_23, %c0_24] : memref<1x4x128xf32, #tpu.memory_space<vmem>>, vector<1x4x128xf32>
    %88 = vector.shape_cast %83 : vector<4x128xf32> to vector<1x4x128xf32>
    %cst_25 = arith.constant dense<0.000000e+00> : vector<4x128xf32>
    %89 = vector.multi_reduction <add>, %88, %cst_25 [0] : vector<1x4x128xf32> to vector<4x128xf32>
    %90 = vector.shape_cast %89 : vector<4x128xf32> to vector<1x4x128xf32>
    %91 = arith.addf %87, %90 : vector<1x4x128xf32>
    %c0_26 = arith.constant 0 : index
    %c0_27 = arith.constant 0 : index
    %c0_28 = arith.constant 0 : index
    %92 = vector.load %arg4[%c0_26, %c0_27, %c0_28] : memref<1x4x128xf32, #tpu.memory_space<vmem>>, vector<1x4x128xf32>
    tpu.vector_store %arg4[%c0_26, %c0_27, %c0_28], %91 {strides = array<i32>} : memref<1x4x128xf32, #tpu.memory_space<vmem>>, vector<1x4x128xf32>,
    %c0_29 = arith.constant 0 : index
    %c0_30 = arith.constant 0 : index
    %c0_31 = arith.constant 0 : index
    %93 = vector.load %arg5[%c0_29, %c0_30, %c0_31] : memref<1x4x128xf32, #tpu.memory_space<vmem>>, vector<1x4x128xf32>
    %94 = vector.shape_cast %86 : vector<4x128xf32> to vector<1x4x128xf32>
    %cst_32 = arith.constant dense<0.000000e+00> : vector<4x128xf32>
    %95 = vector.multi_reduction <add>, %94, %cst_32 [0] : vector<1x4x128xf32> to vector<4x128xf32>
    %96 = vector.shape_cast %95 : vector<4x128xf32> to vector<1x4x128xf32>
    %97 = arith.addf %93, %96 : vector<1x4x128xf32>
    %c0_33 = arith.constant 0 : index
    %c0_34 = arith.constant 0 : index
    %c0_35 = arith.constant 0 : index
    %98 = vector.load %arg5[%c0_33, %c0_34, %c0_35] : memref<1x4x128xf32, #tpu.memory_space<vmem>>, vector<1x4x128xf32>
    tpu.vector_store %arg5[%c0_33, %c0_34, %c0_35], %97 {strides = array<i32>} : memref<1x4x128xf32, #tpu.memory_space<vmem>>, vector<1x4x128xf32>,
    return
  }
  func.func @transform_0(%arg0: i32, %arg1: i32) -> (i32, i32) {
    %c1_i32 = arith.constant 1 : i32
    %0 = arith.muli %arg0, %c1_i32 : i32
    %1 = arith.addi %0, %arg1 : i32
    %c0_i32 = arith.constant 0 : i32
    %2 = arith.minsi %1, %c0_i32 : i32
    %c0_i32_0 = arith.constant 0 : i32
    %c0_i32_1 = arith.constant 0 : i32
    return %2, %c0_i32_0 : i32, i32
  }
  func.func @transform_1(%arg0: i32, %arg1: i32) -> (i32, i32) {
    %c1_i32 = arith.constant 1 : i32
    %0 = arith.muli %arg0, %c1_i32 : i32
    %1 = arith.addi %0, %arg1 : i32
    %c0_i32 = arith.constant 0 : i32
    %2 = arith.minsi %1, %c0_i32 : i32
    %c0_i32_0 = arith.constant 0 : i32
    %c0_i32_1 = arith.constant 0 : i32
    return %2, %c0_i32_0 : i32, i32
  }
  func.func @transform_2(%arg0: i32, %arg1: i32) -> (i32, i32, i32) {
    %c0_i32 = arith.constant 0 : i32
    %c0_i32_0 = arith.constant 0 : i32
    %c0_i32_1 = arith.constant 0 : i32
    return %arg0, %c0_i32, %c0_i32_0 : i32, i32, i32
  }
  func.func @transform_3(%arg0: i32, %arg1: i32) -> (i32, i32, i32) {
    %c0_i32 = arith.constant 0 : i32
    %c0_i32_0 = arith.constant 0 : i32
    %c0_i32_1 = arith.constant 0 : i32
    return %arg0, %c0_i32, %c0_i32_0 : i32, i32, i32
  }
}

</mosaic_0001>

<llo_original>
// kernel: tpu_custom_call.1
$region0: #{tpu_custom_call.1}
  #allocation0 [shape = 'u32[]', space=smem, size = 0x4, offset = 0x4, fixed_abs, tag = 'smem constant byte address 0x4 - core index']
  #allocation1 [shape = 'u32[144,128]{1,0:T(1,128)}', space=vmem, size = 0x12000, scoped, tag = 'internal scratch']
  %s0 = inlined_call_operand.hbm [shape: f32[4,128], index: 0, kind: input, shape index: {}]
  %s1 = inlined_call_operand.hbm [shape: f32[4,128], index: 1, kind: input, shape index: {}]
  %s2 = inlined_call_operand.hbm [shape: f32[1,4,128], index: 2, kind: output, shape index: {0}]
  %s3 = inlined_call_operand.hbm [shape: f32[1,4,128], index: 3, kind: output, shape index: {1}]
  %4 = xla_tuple %s2, %s3
  %s5 = sld [smem:[#allocation0]]
  $region38: #{tpu_custom_call.1} parent=0
    _
  %s7 = ssub.s32 1, %s5
  %s8 = scalar_select 0, %s7, %s5
  $region1: #{tpu_custom_call.1} parent=0
    #allocation2 [shape = 'u8[2048]{0}', space=vmem, size = 0x800, scoped, tag = 'input window, operand 0, single buffered']
    #allocation3 [shape = 's32[1]{0}', space=sflag, size = 0x4, scoped, tag = 'scoped memory for tpu_custom_call.1']
    #allocation4 [shape = 's32[1]{0}', space=sflag, size = 0x4, scoped, tag = 'scoped memory for tpu_custom_call.1']
    #allocation5 [shape = 'u8[2048]{0}', space=vmem, size = 0x800, scoped, tag = 'input window, operand 1, single buffered']
    #allocation6 [shape = 's32[1]{0}', space=sflag, size = 0x4, scoped, tag = 'scoped memory for tpu_custom_call.1']
    #allocation7 [shape = 'u8[2048]{0}', space=vmem, size = 0x800, scoped, tag = 'output window, operand 0, single buffered']
    #allocation8 [shape = 'u8[2048]{0}', space=vmem, size = 0x800, scoped, tag = 'output window, operand 1, single buffered']
    #allocation9 [shape = 's32[1]{0}', space=sflag, size = 0x4, scoped, tag = 'scoped memory for tpu_custom_call.1']
    %9 = vsyncpa [#allocation3], 0
    %10 = vsyncpa [#allocation6], 0
    %11 = vsyncpa [#allocation4], 0
    %12 = vsyncpa [#allocation9], 0
    // Predicated region
    $region2: #{tpu_custom_call.1} parent=1 // pred_check
      _
    $region3: #{tpu_custom_call.1} parent=1 // pred_check_branch
      %14 = sbr.rel (0) target = $region5
    $region4: #{tpu_custom_call.1} parent=1 // pred_region
      %s15 = sadd.s32 0, 0
      %p16 = scmp.lt.s32.totalorder %s15, 0
      %s17 = scalar_select %p16, %s15, 0
      %s19 = ssub.s32 64, 64
      %20 = vsyncadd [#allocation3], %s19
      %s21 = smul.addr %s17, 64
      %s22 = scalar_lea.hbm %s0, %s21
      %s24 = sshll.u32 [#allocation2], 4
      %s25 = int_to_ptr.vmem [resolvable:$true] %s24
      %27 = dma.hbm_to_vmem [thread:$0]  %s22, 64, %s25, [#allocation3]
    $region5: #{tpu_custom_call.1} parent=1 // pred_fallthru
      _
    // Predicated region
    $region6: #{tpu_custom_call.1} parent=1 // pred_check
      _
    $region7: #{tpu_custom_call.1} parent=1 // pred_check_branch
      %29 = sbr.rel (0) target = $region9
    $region8: #{tpu_custom_call.1} parent=1 // pred_region
      %s30 = sadd.s32 0, 0
      %p31 = scmp.lt.s32.totalorder %s30, 0
      %s32 = scalar_select %p31, %s30, 0
      %s34 = ssub.s32 64, 64
      %35 = vsyncadd [#allocation6], %s34
      %s36 = smul.addr %s32, 64
      %s37 = scalar_lea.hbm %s1, %s36
      %s39 = sshll.u32 [#allocation5], 4
      %s40 = int_to_ptr.vmem [resolvable:$true] %s39
      %42 = dma.hbm_to_vmem [thread:$0]  %s37, 64, %s40, [#allocation6]
    $region9: #{tpu_custom_call.1} parent=1 // pred_fallthru
      _
    // Predicated region
    $region10: #{tpu_custom_call.1} parent=1 // pred_check
      _
    $region11: #{tpu_custom_call.1} parent=1 // pred_check_branch
      %44 = sbr.rel (0) target = $region13
    $region12: #{tpu_custom_call.1} parent=1 // pred_region
      %45 = dma.done [#allocation3], 64
    $region13: #{tpu_custom_call.1} parent=1 // pred_fallthru
      _
    // Predicated region
    $region14: #{tpu_custom_call.1} parent=1 // pred_check
      _
    $region15: #{tpu_custom_call.1} parent=1 // pred_check_branch
      %47 = sbr.rel (0) target = $region17
    $region16: #{tpu_custom_call.1} parent=1 // pred_region
      %48 = dma.done [#allocation6], 64
    $region17: #{tpu_custom_call.1} parent=1 // pred_fallthru
      _
    %s49 = sadd.s32 0, 0
    %p50 = scmp.lt.s32.totalorder %s49, 0
    %s51 = scalar_select %p50, %s49, 0
    %s52 = sadd.s32 0, 0
    %p53 = scmp.lt.s32.totalorder %s52, 0
    %s54 = scalar_select %p53, %s52, 0
    %v55 = vld [vmem:[#allocation2] sm:$0xf]
    %v56 = vld [vmem:[#allocation5] sm:$0xf]
    %p57 = scmp.eq.s32.totalorder 0, 0
    // Predicated region
    $region18: #{tpu_custom_call.1} parent=1 // pred_check
      %p58 = pneg %p57
    $region19: #{tpu_custom_call.1} parent=1 // pred_check_branch
      %60 = sbr.rel (%p58) target = $region21
    $region20: #{tpu_custom_call.1} parent=1 // pred_region
      %61 = vst [vmem:[#allocation7] sm:$0xf] 0.0
      %62 = vst [vmem:[#allocation8] sm:$0xf] 0.0
    $region21: #{tpu_custom_call.1} parent=1 // pred_fallthru
      _
    %v63 = vsub.f32 %v55, %v56
    %v64 = vmul.f32 %v63, %v63
    %s65 = sadd.s32 0, 0
    %s66 = smul.u32 %s65, 512
    %v67 = vlaneseq
    %v68 = vshrl.u32 %v67, 7
    %v69 = vlaneseq
    %v70 = vand.u32 %v69, 127
    %v71 = vmul.u32 %v68, 128
    %v72 = vstv %s66
    %v73 = vadd.s32 %v72, %v71
    %v74 = vadd.s32 %v73, %v70
    %vm75 = vcmp.lt.s32.totalorder %v74, 512
    %v76 = vshra.s32 %v74, 2
    %v77 = vcvt.s32.f32 %v76
    %v78 = vmul.f32 %v77, 0.125
    %v79 = vfloor.f32 %v78
    %v80 = vcvt.f32.s32.to.zero.pseudo %v79
    %v81 = vmul.u32 %v80, 8
    %v82 = vsub.s32 %v76, %v81
    %vm83 = vcmp.ge.s32.totalorder %v82, 8
    %v84 = vsel %vm83, 1, 0
    %v85 = vadd.s32 %v80, %v84
    %vm86 = vcmp.lt.s32.totalorder %v82, 0
    %v87 = vsel %vm86, 1, 0
    %v88 = vsub.s32 %v85, %v87
    %v89 = vmul.u32 %v88, 8
    %v90 = vsub.s32 %v76, %v89
    %v91 = vcvt.s32.f32 %v88
    %v92 = vmul.f32 %v91, 0.125
    %v93 = vfloor.f32 %v92
    %v94 = vcvt.f32.s32.to.zero.pseudo %v93
    %v95 = vmul.u32 %v94, 8
    %v96 = vsub.s32 %v88, %v95
    %vm97 = vcmp.ge.s32.totalorder %v96, 8
    %v98 = vsel %vm97, 1, 0
    %v99 = vadd.s32 %v94, %v98
    %vm100 = vcmp.lt.s32.totalorder %v96, 0
    %v101 = vsel %vm100, 1, 0
    %v102 = vsub.s32 %v99, %v101
    %v103 = vmul.u32 %v102, 8
    %v104 = vsub.s32 %v88, %v103
    %vm105 = vcmp.ge.s32.totalorder %v104, 0
    %vm106 = vcmp.lt.s32.totalorder %v104, 3
    %vm107 = vmand %vm105, %vm106
    %vm108 = vcmp.ge.s32.totalorder %v90, 0
    %vm109 = vmand %vm107, %vm108
    %vm110 = vcmp.lt.s32.totalorder %v90, 3
    %vm111 = vmand %vm109, %vm110
    %vm112 = vcmp.ge.s32.totalorder %v104, 3
    %vm113 = vcmp.lt.s32.totalorder %v104, 8
    %vm114 = vmand %vm112, %vm113
    %vm115 = vcmp.ge.s32.totalorder %v90, 3
    %vm116 = vmand %vm114, %vm115
    %vm117 = vcmp.lt.s32.totalorder %v90, 8
    %vm118 = vmand %vm116, %vm117
    %vm119 = vmor %vm111, %vm118
    %v120 = vsel %vm75, %v64, 0.0
    %vm121 = vmand %vm75, %vm119
    %v122 = vsel %vm121, %v64, 0.0
    %v123 = vld [vmem:[#allocation7] sm:$0xf]
    %v124 = vadd.f32 %v120, 0.0
    %v125 = vadd.f32 %v123, %v124
    %126 = vst [vmem:[#allocation7] sm:$0xf] %v125
    %v127 = vld [vmem:[#allocation8] sm:$0xf]
    %v128 = vadd.f32 %v122, 0.0
    %v129 = vadd.f32 %v127, %v128
    %130 = vst [vmem:[#allocation8] sm:$0xf] %v129
    // Predicated region
    $region22: #{tpu_custom_call.1} parent=1 // pred_check
      _
    $region23: #{tpu_custom_call.1} parent=1 // pred_check_branch
      %132 = sbr.rel (0) target = $region25
    $region24: #{tpu_custom_call.1} parent=1 // pred_region
      %s134 = ssub.s32 64, 64
      %135 = vsyncadd [#allocation4], %s134
      %s137 = sshll.u32 [#allocation7], 4
      %s138 = int_to_ptr.vmem [resolvable:$true] %s137
      %140 = dma.vmem_to_hbm [thread:$0]  %s138, 64, %s2, [#allocation4]
    $region25: #{tpu_custom_call.1} parent=1 // pred_fallthru
      _
    // Predicated region
    $region26: #{tpu_custom_call.1} parent=1 // pred_check
      _
    $region27: #{tpu_custom_call.1} parent=1 // pred_check_branch
      %142 = sbr.rel (0) target = $region29
    $region28: #{tpu_custom_call.1} parent=1 // pred_region
      %s144 = ssub.s32 64, 64
      %145 = vsyncadd [#allocation9], %s144
      %s147 = sshll.u32 [#allocation8], 4
      %s148 = int_to_ptr.vmem [resolvable:$true] %s147
      %150 = dma.vmem_to_hbm [thread:$0]  %s148, 64, %s3, [#allocation9]
    $region29: #{tpu_custom_call.1} parent=1 // pred_fallthru
      _
    // Predicated region
    $region30: #{tpu_custom_call.1} parent=1 // pred_check
      _
    $region31: #{tpu_custom_call.1} parent=1 // pred_check_branch
      %152 = sbr.rel (0) target = $region33
    $region32: #{tpu_custom_call.1} parent=1 // pred_region
      %153 = dma.done [#allocation4], 64
    $region33: #{tpu_custom_call.1} parent=1 // pred_fallthru
      _
    // Predicated region
    $region34: #{tpu_custom_call.1} parent=1 // pred_check
      _
    $region35: #{tpu_custom_call.1} parent=1 // pred_check_branch
      %155 = sbr.rel (0) target = $region37
    $region36: #{tpu_custom_call.1} parent=1 // pred_region
      %156 = dma.done [#allocation9], 64
    $region37: #{tpu_custom_call.1} parent=1 // pred_fallthru
      _
    %157 = vsyncpa [#allocation3], 1
    %158 = vsyncpa [#allocation6], 1
    %159 = vsyncpa [#allocation4], 1
    %160 = vsyncpa [#allocation9], 1

</llo_original>
